<compile_context>
chip_gen: v6e
topology: v6e:2x2x1
jax: 0.10.0
libtpu: 0.0.40
codegen_flags: <defaults>
</compile_context>

<pallas_src>
import functools

import jax
import jax.numpy as jnp
from jax import lax
from jax.experimental import pallas as pl
from jax.experimental.pallas import tpu as pltpu

LN_EPS = 1e-5  # nn.LayerNorm default


def _round_up(x, m):
    return (x + m - 1) // m * m


def _gelu(x, approximate):
    if approximate:
        # tanh approximation runs on the EUP (its own VLIW slot).
        c = jnp.float32(0.7978845608028654)  # sqrt(2/pi)
        return 0.5 * x * (1.0 + jnp.tanh(c * (x + 0.044715 * x * x * x)))
    # Exact erf formulation == nn.GELU() default.
    return 0.5 * x * (1.0 + lax.erf(x * jnp.float32(0.7071067811865476)))


def _projection_head_kernel(x_ref, w1_ref, w2_ref, params_ref, o_ref, *,
                            p_real, approximate_gelu):
    # x tile: (TB, D_pad); may be bf16 if the wrapper chose bf16 MXU operands.
    x = x_ref[...]

    # Packed per-feature parameters (f32): rows 0..3 = b1, b2, gamma, beta.
    b1 = params_ref[0:1, :]
    b2 = params_ref[1:2, :]
    gamma = params_ref[2:3, :]
    beta = params_ref[3:4, :]

    # linear_layer1 (MXU, f32 accumulation) + bias
    h = jnp.dot(x, w1_ref[...], preferred_element_type=jnp.float32) + b1

    # gelu (f32 elementwise)
    h = _gelu(h, approximate_gelu)

    # linear_layer2 (cast back to the MXU dtype; accumulate in f32) + bias
    h = h.astype(w2_ref.dtype)
    y = jnp.dot(h, w2_ref[...], preferred_element_type=jnp.float32) + b2

    # dropout: inference-mode identity (PyTorch eval).
    # TODO(synk): training-mode dropout (pltpu.prng_*) not implemented — eval semantics only.

    # LayerNorm over the real feature columns.  Padded columns of y are exactly
    # zero by construction (zero-padded w1/w2 columns and biases), so sum(y)
    # and sum(y*y) over the padded axis equal sums over the real columns —
    # no iota/where mask needed.
    inv_p = jnp.float32(1.0 / p_real)
    mean = jnp.sum(y, axis=-1, keepdims=True) * inv_p
    var = jnp.sum(y * y, axis=-1, keepdims=True) * inv_p - mean * mean
    var = jnp.maximum(var, 0.0)  # guard E[y^2]-mean^2 cancellation
    inv = lax.rsqrt(var + LN_EPS)
    # Padded output columns get gamma=beta=0 and are sliced off by the wrapper.
    o_ref[...] = ((y - mean) * inv * gamma + beta).astype(o_ref.dtype)


def _vmem_budget_bytes():
    """~85% of physical VMEM; fall back to the smallest generation (v7x)."""
    try:
        cap = int(pltpu.get_tpu_info().vmem_capacity_bytes)
    except Exception:
        cap = 64 << 20
    return int(cap * 0.85)


def projection_head(x, w1, b1, w2, b2, gamma, beta, *,
                    block_b=512, mxu_dtype=None, out_dtype=None,
                    approximate_gelu=False):
    """Fused ProjectionHead forward.

    x: (B, D), w1: (D, P), w2: (P, P), biases / gamma / beta: (P,) or (1, P).
    mxu_dtype: optional dtype (e.g. jnp.bfloat16) for matmul operands;
               accumulation and GELU/LayerNorm math stay in f32.
    out_dtype: output dtype (default: x.dtype).
    """
    B, D = x.shape
    P = w1.shape[1]
    out_dtype = x.dtype if out_dtype is None else out_dtype

    # Lane-dense feature dims.
    D_pad = _round_up(D, 128)
    P_pad = _round_up(P, 128)

    x_isize = jnp.dtype(mxu_dtype if mxu_dtype is not None else x.dtype).itemsize
    w_isize = x_isize  # weights are cast alongside x
    out_isize = jnp.dtype(out_dtype).itemsize

    budget = _vmem_budget_bytes()

    def vmem_needed(tb):
        return (2 * tb * D_pad * x_isize          # x tile (double buffered)
                + 2 * tb * P_pad * out_isize      # out tile (double buffered)
                + D_pad * P_pad * w_isize         # w1 (resident, single buffer)
                + P_pad * P_pad * w_isize         # w2 (resident, single buffer)
                + 8 * P_pad * 4                   # packed b1/b2/gamma/beta
                + (2 << 20))                      # compiler scratch headroom

    # Batch tile: multiple of 8 (sublane), sized to the per-generation budget.
    TB = max(8, _round_up(min(block_b, _round_up(B, 8)), 8))
    while TB > 8 and vmem_needed(TB) > budget:
        TB = max(8, _round_up(TB // 2, 8))
    B_pad = _round_up(B, TB)
    # TODO(synk): if f32 w1+w2 alone exceed the budget (huge D/P on v7x), add a
    # K-reduction grid axis ("arbitrary") to stream weights; not needed here.

    def pad2(a, rows, cols):
        a = a.reshape((-1, a.shape[-1])) if a.ndim == 2 else a.reshape(1, -1)
        return jnp.pad(a, ((0, rows - a.shape[0]), (0, cols - a.shape[1])))

    xp = pad2(x, B_pad, D_pad)
    w1p = pad2(w1, D_pad, P_pad)
    w2p = pad2(w2, P_pad, P_pad)

    # Pack the four per-feature vectors into one resident (8, P_pad) f32 slab.
    params = jnp.zeros((8, P_pad), jnp.float32)
    params = params.at[0, :P].set(jnp.asarray(b1, jnp.float32).reshape(-1))
    params = params.at[1, :P].set(jnp.asarray(b2, jnp.float32).reshape(-1))
    params = params.at[2, :P].set(jnp.asarray(gamma, jnp.float32).reshape(-1))
    params = params.at[3, :P].set(jnp.asarray(beta, jnp.float32).reshape(-1))

    if mxu_dtype is not None:
        # Halves HBM traffic for x / weights; matmuls run at bf16 MXU rate.
        xp = xp.astype(mxu_dtype)
        w1p = w1p.astype(mxu_dtype)
        w2p = w2p.astype(mxu_dtype)

    grid = (B_pad // TB,)
    kernel = functools.partial(_projection_head_kernel, p_real=P,
                               approximate_gelu=approximate_gelu)

    flops = 2 * B_pad * D_pad * P_pad + 2 * B_pad * P_pad * P_pad
    bytes_accessed = (xp.size * xp.dtype.itemsize
                      + w1p.size * w1p.dtype.itemsize
                      + w2p.size * w2p.dtype.itemsize
                      + params.size * 4
                      + B_pad * P_pad * out_isize)
    cost = pl.CostEstimate(flops=flops,
                           transcendentals=B_pad * P_pad,   # erf/tanh (+rsqrt/row)
                           bytes_accessed=bytes_accessed)

    def build(single_buffer_residents, vmem_limit):
        def res_spec(shape):
            if single_buffer_residents:
                # Constant index_map -> one buffer is enough; halves the VMEM
                # footprint of the dominant (weight) consumers.
                return pl.BlockSpec(shape, lambda i: (0, 0),
                                    pipeline_mode=pl.Buffered(1))
            return pl.BlockSpec(shape, lambda i: (0, 0))

        return pl.pallas_call(
            kernel,
            out_shape=jax.ShapeDtypeStruct((B_pad, P_pad), out_dtype),
            grid=grid,
            in_specs=[
                pl.BlockSpec((TB, D_pad), lambda i: (i, 0)),   # x (streamed)
                res_spec((D_pad, P_pad)),                      # w1 (resident)
                res_spec((P_pad, P_pad)),                      # w2 (resident)
                res_spec((8, P_pad)),                          # packed params
            ],
            out_specs=pl.BlockSpec((TB, P_pad), lambda i: (i, 0)),
            compiler_params=pltpu.CompilerParams(
                dimension_semantics=("parallel",),
                vmem_limit_bytes=vmem_limit,
            ),
            cost_estimate=cost,
        )

    vmem_limit = int(min(budget, max(vmem_needed(TB) + (4 << 20), 8 << 20)))
    try:
        out = jax.block_until_ready(
            build(True, vmem_limit)(xp, w1p, w2p, params))
    except Exception:
        # Fallback for jax versions without BlockSpec.pipeline_mode / Buffered(1):
        # default double-buffered resident specs with a correspondingly larger limit.
        vmem_limit_fb = int(min(budget, max(2 * vmem_needed(TB), 8 << 20)))
        out = jax.block_until_ready(
            build(False, vmem_limit_fb)(xp, w1p, w2p, params))

    return out[:B, :P]


def _reference(x, w1, b1, w2, b2, gamma, beta):
    h = x @ w1 + b1
    h = 0.5 * h * (1.0 + lax.erf(h / jnp.sqrt(2.0)))
    y = h @ w2 + b2
    mean = jnp.mean(y, axis=-1, keepdims=True)
    var = jnp.mean((y - mean) ** 2, axis=-1, keepdims=True)
    return (y - mean) / jnp.sqrt(var + LN_EPS) * gamma + beta


if __name__ == "__main__":
    # Small shapes consistent with the module: batch=8, input_dim=32, projection_dim=32.
    # (At this size the kernel is launch-overhead bound; the tiling / padding /
    #  bf16 / VMEM-budget paths are aimed at production-sized B / D / P.)
    B, D, P = 8, 32, 32
    key = jax.random.PRNGKey(0)
    kx, kw1, kb1, kw2, kb2 = jax.random.split(key, 5)

    x = jax.random.normal(kx, (B, D), dtype=jnp.float32)
    w1 = jax.random.normal(kw1, (D, P), dtype=jnp.float32) * 0.05
    b1 = jax.random.normal(kb1, (1, P), dtype=jnp.float32) * 0.01
    w2 = jax.random.normal(kw2, (P, P), dtype=jnp.float32) * 0.05
    b2 = jax.random.normal(kb2, (1, P), dtype=jnp.float32) * 0.01
    gamma = jnp.ones((1, P), dtype=jnp.float32)
    beta = jnp.zeros((1, P), dtype=jnp.float32)

    ref = _reference(x, w1, b1, w2, b2, gamma, beta)

    # f32 path: matches the PyTorch module (eval mode).
    out = jax.block_until_ready(projection_head(x, w1, b1, w2, b2, gamma, beta))
    assert out.shape == (B, P)
    assert jnp.allclose(out, ref, atol=1e-5, rtol=1e-5), "f32 mismatch vs reference"

    # bf16-MXU path (f32 accumulation + f32 LayerNorm): loose tolerance check.
    out_bf16 = jax.block_until_ready(
        projection_head(x, w1, b1, w2, b2, gamma, beta, mxu_dtype=jnp.bfloat16))
    assert out_bf16.shape == (B, P)
    assert jnp.allclose(out_bf16, ref, atol=1e-1, rtol=1e-1), "bf16 mismatch vs reference"

    print("KERNEL_OK")
</pallas_src>

<mosaic_0001>
module attributes {stable_mosaic.version = 11 : i64} {
  func.func @_projection_head_kernel(%arg0: i32, %arg1: memref<8x128xf32, #tpu.memory_space<vmem>>, %arg2: memref<128x128xf32, #tpu.memory_space<vmem>>, %arg3: memref<128x128xf32, #tpu.memory_space<vmem>>, %arg4: memref<8x128xf32, #tpu.memory_space<vmem>>, %arg5: memref<8x128xf32, #tpu.memory_space<vmem>>) attributes {dimension_semantics = [#tpu.dimension_semantics<parallel>], iteration_bounds = array<i64: 1>, scalar_prefetch = 0 : i64, scratch_operands = 0 : i64, tpu.core_type = #tpu.core_type<tc>, window_params = [{transform_indices = @transform_0, window_bounds = array<i64: 8, 128>}, {pipeline_mode = #tpu.pipeline_mode<synchronous>, transform_indices = @transform_1, window_bounds = array<i64: 128, 128>}, {pipeline_mode = #tpu.pipeline_mode<synchronous>, transform_indices = @transform_2, window_bounds = array<i64: 128, 128>}, {pipeline_mode = #tpu.pipeline_mode<synchronous>, transform_indices = @transform_3, window_bounds = array<i64: 8, 128>}, {transform_indices = @transform_4, window_bounds = array<i64: 8, 128>}]} {
    %c0 = arith.constant 0 : index
    %c0_0 = arith.constant 0 : index
    %0 = vector.load %arg1[%c0, %c0_0] : memref<8x128xf32, #tpu.memory_space<vmem>>, vector<8x128xf32>
    %c0_1 = arith.constant 0 : index
    %c0_2 = arith.constant 0 : index
    %1 = vector.load %arg4[%c0_1, %c0_2] : memref<8x128xf32, #tpu.memory_space<vmem>>, vector<1x128xf32>
    %c1 = arith.constant 1 : index
    %c0_3 = arith.constant 0 : index
    %2 = vector.load %arg4[%c1, %c0_3] : memref<8x128xf32, #tpu.memory_space<vmem>>, vector<1x128xf32>
    %c2 = arith.constant 2 : index
    %c0_4 = arith.constant 0 : index
    %3 = vector.load %arg4[%c2, %c0_4] : memref<8x128xf32, #tpu.memory_space<vmem>>, vector<1x128xf32>
    %c3 = arith.constant 3 : index
    %c0_5 = arith.constant 0 : index
    %4 = vector.load %arg4[%c3, %c0_5] : memref<8x128xf32, #tpu.memory_space<vmem>>, vector<1x128xf32>
    %c0_6 = arith.constant 0 : index
    %c0_7 = arith.constant 0 : index
    %5 = vector.load %arg2[%c0_6, %c0_7] : memref<128x128xf32, #tpu.memory_space<vmem>>, vector<128x128xf32>
    %cst = arith.constant dense<0.000000e+00> : vector<8x128xf32>
    %6 = tpu.matmul %0, %5, %cst {dimension_numbers = #tpu.dot_dimension_numbers<[1], [0], [0], [1], [0, 0, 1, 1], [], []>} : vector<8x128xf32>, vector<128x128xf32>, vector<8x128xf32> -> vector<8x128xf32>
    %7 = vector.broadcast %1 : vector<1x128xf32> to vector<8x128xf32>
    %8 = arith.addf %6, %7 : vector<8x128xf32>
    %cst_8 = arith.constant 5.000000e-01 : f32
    %9 = vector.broadcast %cst_8 : f32 to vector<8x128xf32>
    %10 = arith.mulf %9, %8 : vector<8x128xf32>
    %cst_9 = arith.constant 0.707106769 : f32
    %11 = vector.broadcast %cst_9 : f32 to vector<8x128xf32>
    %12 = arith.mulf %8, %11 : vector<8x128xf32>
    %13 = math.erf %12 : vector<8x128xf32>
    %cst_10 = arith.constant 1.000000e+00 : f32
    %14 = vector.broadcast %cst_10 : f32 to vector<8x128xf32>
    %15 = arith.addf %14, %13 : vector<8x128xf32>
    %16 = arith.mulf %10, %15 : vector<8x128xf32>
    %c0_11 = arith.constant 0 : index
    %c0_12 = arith.constant 0 : index
    %17 = vector.load %arg3[%c0_11, %c0_12] : memref<128x128xf32, #tpu.memory_space<vmem>>, vector<128x128xf32>
    %cst_13 = arith.constant dense<0.000000e+00> : vector<8x128xf32>
    %18 = tpu.matmul %16, %17, %cst_13 {dimension_numbers = #tpu.dot_dimension_numbers<[1], [0], [0], [1], [0, 0, 1, 1], [], []>} : vector<8x128xf32>, vector<128x128xf32>, vector<8x128xf32> -> vector<8x128xf32>
    %19 = vector.broadcast %2 : vector<1x128xf32> to vector<8x128xf32>
    %20 = arith.addf %18, %19 : vector<8x128xf32>
    %cst_14 = arith.constant dense<0.000000e+00> : vector<8xf32>
    %21 = vector.multi_reduction <add>, %20, %cst_14 [1] : vector<8x128xf32> to vector<8xf32>
    %22 = vector.shape_cast %21 : vector<8xf32> to vector<8x1xf32>
    %cst_15 = arith.constant 3.125000e-02 : f32
    %23 = vector.broadcast %cst_15 : f32 to vector<8x1xf32>
    %24 = arith.mulf %22, %23 : vector<8x1xf32>
    %25 = arith.mulf %20, %20 : vector<8x128xf32>
    %cst_16 = arith.constant dense<0.000000e+00> : vector<8xf32>
    %26 = vector.multi_reduction <add>, %25, %cst_16 [1] : vector<8x128xf32> to vector<8xf32>
    %27 = vector.shape_cast %26 : vector<8xf32> to vector<8x1xf32>
    %cst_17 = arith.constant 3.125000e-02 : f32
    %28 = vector.broadcast %cst_17 : f32 to vector<8x1xf32>
    %29 = arith.mulf %27, %28 : vector<8x1xf32>
    %30 = arith.mulf %24, %24 : vector<8x1xf32>
    %31 = arith.subf %29, %30 : vector<8x1xf32>
    %cst_18 = arith.constant 0.000000e+00 : f32
    %32 = vector.broadcast %cst_18 : f32 to vector<8x1xf32>
    %33 = arith.maximumf %31, %32 : vector<8x1xf32>
    %cst_19 = arith.constant 9.99999974E-6 : f32
    %34 = vector.broadcast %cst_19 : f32 to vector<8x1xf32>
    %35 = arith.addf %33, %34 : vector<8x1xf32>
    %36 = math.rsqrt %35 : vector<8x1xf32>
    %37 = vector.broadcast %24 : vector<8x1xf32> to vector<8x128xf32>
    %38 = arith.subf %20, %37 : vector<8x128xf32>
    %39 = vector.broadcast %36 : vector<8x1xf32> to vector<8x128xf32>
    %40 = arith.mulf %38, %39 : vector<8x128xf32>
    %41 = vector.broadcast %3 : vector<1x128xf32> to vector<8x128xf32>
    %42 = arith.mulf %40, %41 : vector<8x128xf32>
    %43 = vector.broadcast %4 : vector<1x128xf32> to vector<8x128xf32>
    %44 = arith.addf %42, %43 : vector<8x128xf32>
    %c0_20 = arith.constant 0 : index
    %c0_21 = arith.constant 0 : index
    %45 = vector.load %arg5[%c0_20, %c0_21] : memref<8x128xf32, #tpu.memory_space<vmem>>, vector<8x128xf32>
    tpu.vector_store %arg5[%c0_20, %c0_21], %44 {strides = array<i32>} : memref<8x128xf32, #tpu.memory_space<vmem>>, vector<8x128xf32>,
    return
  }
  func.func @transform_0(%arg0: i32) -> (i32, i32) {
    %c0_i32 = arith.constant 0 : i32
    %c0_i32_0 = arith.constant 0 : i32
    return %arg0, %c0_i32 : i32, i32
  }
  func.func @transform_1(%arg0: i32) -> (i32, i32) {
    %c0_i32 = arith.constant 0 : i32
    %c0_i32_0 = arith.constant 0 : i32
    %c0_i32_1 = arith.constant 0 : i32
    return %c0_i32, %c0_i32_0 : i32, i32
  }
  func.func @transform_2(%arg0: i32) -> (i32, i32) {
    %c0_i32 = arith.constant 0 : i32
    %c0_i32_0 = arith.constant 0 : i32
    %c0_i32_1 = arith.constant 0 : i32
    return %c0_i32, %c0_i32_0 : i32, i32
  }
  func.func @transform_3(%arg0: i32) -> (i32, i32) {
    %c0_i32 = arith.constant 0 : i32
    %c0_i32_0 = arith.constant 0 : i32
    %c0_i32_1 = arith.constant 0 : i32
    return %c0_i32, %c0_i32_0 : i32, i32
  }
  func.func @transform_4(%arg0: i32) -> (i32, i32) {
    %c0_i32 = arith.constant 0 : i32
    %c0_i32_0 = arith.constant 0 : i32
    return %arg0, %c0_i32 : i32, i32
  }
}

module attributes {stable_mosaic.version = 11 : i64} {
  func.func @_projection_head_kernel(%arg0: i32, %arg1: memref<8x128xf32, #tpu.memory_space<vmem>>, %arg2: memref<128x128xf32, #tpu.memory_space<vmem>>, %arg3: memref<128x128xf32, #tpu.memory_space<vmem>>, %arg4: memref<8x128xf32, #tpu.memory_space<vmem>>, %arg5: memref<8x128xf32, #tpu.memory_space<vmem>>) attributes {dimension_semantics = [#tpu.dimension_semantics<parallel>], iteration_bounds = array<i64: 1>, scalar_prefetch = 0 : i64, scratch_operands = 0 : i64, tpu.core_type = #tpu.core_type<tc>, window_params = [{transform_indices = @transform_0, window_bounds = array<i64: 8, 128>}, {pipeline_mode = #tpu.pipeline_mode<synchronous>, transform_indices = @transform_1, window_bounds = array<i64: 128, 128>}, {pipeline_mode = #tpu.pipeline_mode<synchronous>, transform_indices = @transform_2, window_bounds = array<i64: 128, 128>}, {pipeline_mode = #tpu.pipeline_mode<synchronous>, transform_indices = @transform_3, window_bounds = array<i64: 8, 128>}, {transform_indices = @transform_4, window_bounds = array<i64: 8, 128>}]} {
    %c0 = arith.constant 0 : index
    %c0_0 = arith.constant 0 : index
    %0 = vector.load %arg1[%c0, %c0_0] : memref<8x128xf32, #tpu.memory_space<vmem>>, vector<8x128xf32>
    %c0_1 = arith.constant 0 : index
    %c0_2 = arith.constant 0 : index
    %1 = vector.load %arg4[%c0_1, %c0_2] : memref<8x128xf32, #tpu.memory_space<vmem>>, vector<1x128xf32>
    %c1 = arith.constant 1 : index
    %c0_3 = arith.constant 0 : index
    %2 = vector.load %arg4[%c1, %c0_3] : memref<8x128xf32, #tpu.memory_space<vmem>>, vector<1x128xf32>
    %c2 = arith.constant 2 : index
    %c0_4 = arith.constant 0 : index
    %3 = vector.load %arg4[%c2, %c0_4] : memref<8x128xf32, #tpu.memory_space<vmem>>, vector<1x128xf32>
    %c3 = arith.constant 3 : index
    %c0_5 = arith.constant 0 : index
    %4 = vector.load %arg4[%c3, %c0_5] : memref<8x128xf32, #tpu.memory_space<vmem>>, vector<1x128xf32>
    %c0_6 = arith.constant 0 : index
    %c0_7 = arith.constant 0 : index
    %5 = vector.load %arg2[%c0_6, %c0_7] : memref<128x128xf32, #tpu.memory_space<vmem>>, vector<128x128xf32>
    %cst = arith.constant dense<0.000000e+00> : vector<8x128xf32>
    %6 = tpu.matmul %0, %5, %cst {dimension_numbers = #tpu.dot_dimension_numbers<[1], [0], [0], [1], [0, 0, 1, 1], [], []>} : vector<8x128xf32>, vector<128x128xf32>, vector<8x128xf32> -> vector<8x128xf32>
    %7 = vector.broadcast %1 : vector<1x128xf32> to vector<8x128xf32>
    %8 = arith.addf %6, %7 : vector<8x128xf32>
    %cst_8 = arith.constant 5.000000e-01 : f32
    %9 = vector.broadcast %cst_8 : f32 to vector<8x128xf32>
    %10 = arith.mulf %9, %8 : vector<8x128xf32>
    %cst_9 = arith.constant 0.707106769 : f32
    %11 = vector.broadcast %cst_9 : f32 to vector<8x128xf32>
    %12 = arith.mulf %8, %11 : vector<8x128xf32>
    %13 = math.erf %12 : vector<8x128xf32>
    %cst_10 = arith.constant 1.000000e+00 : f32
    %14 = vector.broadcast %cst_10 : f32 to vector<8x128xf32>
    %15 = arith.addf %14, %13 : vector<8x128xf32>
    %16 = arith.mulf %10, %15 : vector<8x128xf32>
    %c0_11 = arith.constant 0 : index
    %c0_12 = arith.constant 0 : index
    %17 = vector.load %arg3[%c0_11, %c0_12] : memref<128x128xf32, #tpu.memory_space<vmem>>, vector<128x128xf32>
    %cst_13 = arith.constant dense<0.000000e+00> : vector<8x128xf32>
    %18 = tpu.matmul %16, %17, %cst_13 {dimension_numbers = #tpu.dot_dimension_numbers<[1], [0], [0], [1], [0, 0, 1, 1], [], []>} : vector<8x128xf32>, vector<128x128xf32>, vector<8x128xf32> -> vector<8x128xf32>
    %19 = vector.broadcast %2 : vector<1x128xf32> to vector<8x128xf32>
    %20 = arith.addf %18, %19 : vector<8x128xf32>
    %cst_14 = arith.constant dense<0.000000e+00> : vector<8xf32>
    %21 = vector.multi_reduction <add>, %20, %cst_14 [1] : vector<8x128xf32> to vector<8xf32>
    %22 = vector.shape_cast %21 : vector<8xf32> to vector<8x1xf32>
    %cst_15 = arith.constant 3.125000e-02 : f32
    %23 = vector.broadcast %cst_15 : f32 to vector<8x1xf32>
    %24 = arith.mulf %22, %23 : vector<8x1xf32>
    %25 = arith.mulf %20, %20 : vector<8x128xf32>
    %cst_16 = arith.constant dense<0.000000e+00> : vector<8xf32>
    %26 = vector.multi_reduction <add>, %25, %cst_16 [1] : vector<8x128xf32> to vector<8xf32>
    %27 = vector.shape_cast %26 : vector<8xf32> to vector<8x1xf32>
    %cst_17 = arith.constant 3.125000e-02 : f32
    %28 = vector.broadcast %cst_17 : f32 to vector<8x1xf32>
    %29 = arith.mulf %27, %28 : vector<8x1xf32>
    %30 = arith.mulf %24, %24 : vector<8x1xf32>
    %31 = arith.subf %29, %30 : vector<8x1xf32>
    %cst_18 = arith.constant 0.000000e+00 : f32
    %32 = vector.broadcast %cst_18 : f32 to vector<8x1xf32>
    %33 = arith.maximumf %31, %32 : vector<8x1xf32>
    %cst_19 = arith.constant 9.99999974E-6 : f32
    %34 = vector.broadcast %cst_19 : f32 to vector<8x1xf32>
    %35 = arith.addf %33, %34 : vector<8x1xf32>
    %36 = math.rsqrt %35 : vector<8x1xf32>
    %37 = vector.broadcast %24 : vector<8x1xf32> to vector<8x128xf32>
    %38 = arith.subf %20, %37 : vector<8x128xf32>
    %39 = vector.broadcast %36 : vector<8x1xf32> to vector<8x128xf32>
    %40 = arith.mulf %38, %39 : vector<8x128xf32>
    %41 = vector.broadcast %3 : vector<1x128xf32> to vector<8x128xf32>
    %42 = arith.mulf %40, %41 : vector<8x128xf32>
    %43 = vector.broadcast %4 : vector<1x128xf32> to vector<8x128xf32>
    %44 = arith.addf %42, %43 : vector<8x128xf32>
    %c0_20 = arith.constant 0 : index
    %c0_21 = arith.constant 0 : index
    %45 = vector.load %arg5[%c0_20, %c0_21] : memref<8x128xf32, #tpu.memory_space<vmem>>, vector<8x128xf32>
    tpu.vector_store %arg5[%c0_20, %c0_21], %44 {strides = array<i32>} : memref<8x128xf32, #tpu.memory_space<vmem>>, vector<8x128xf32>,
    return
  }
  func.func @transform_0(%arg0: i32) -> (i32, i32) {
    %c0_i32 = arith.constant 0 : i32
    %c0_i32_0 = arith.constant 0 : i32
    return %arg0, %c0_i32 : i32, i32
  }
  func.func @transform_1(%arg0: i32) -> (i32, i32) {
    %c0_i32 = arith.constant 0 : i32
    %c0_i32_0 = arith.constant 0 : i32
    %c0_i32_1 = arith.constant 0 : i32
    return %c0_i32, %c0_i32_0 : i32, i32
  }
  func.func @transform_2(%arg0: i32) -> (i32, i32) {
    %c0_i32 = arith.constant 0 : i32
    %c0_i32_0 = arith.constant 0 : i32
    %c0_i32_1 = arith.constant 0 : i32
    return %c0_i32, %c0_i32_0 : i32, i32
  }
  func.func @transform_3(%arg0: i32) -> (i32, i32) {
    %c0_i32 = arith.constant 0 : i32
    %c0_i32_0 = arith.constant 0 : i32
    %c0_i32_1 = arith.constant 0 : i32
    return %c0_i32, %c0_i32_0 : i32, i32
  }
  func.func @transform_4(%arg0: i32) -> (i32, i32) {
    %c0_i32 = arith.constant 0 : i32
    %c0_i32_0 = arith.constant 0 : i32
    return %arg0, %c0_i32 : i32, i32
  }
}

</mosaic_0001>

<llo_original>
// kernel: tpu_custom_call.1
$region0: #{tpu_custom_call.1}
  #allocation0 [shape = 'u32[]', space=smem, size = 0x4, offset = 0x4, fixed_abs, tag = 'smem constant byte address 0x4 - core index']
  #allocation1 [shape = 'u32[144,128]{1,0:T(1,128)}', space=vmem, size = 0x12000, scoped, tag = 'internal scratch']
  %s0 = inlined_call_operand.hbm [shape: f32[8,128], index: 0, kind: input, shape index: {}]
  %s1 = inlined_call_operand.hbm [shape: f32[128,128], index: 1, kind: input, shape index: {}]
  %s2 = inlined_call_operand.hbm [shape: f32[128,128], index: 2, kind: input, shape index: {}]
  %s3 = inlined_call_operand.hbm [shape: f32[8,128], index: 3, kind: input, shape index: {}]
  %s4 = inlined_call_operand.hbm [shape: f32[8,128], index: 4, kind: output, shape index: {}]
  %s5 = sld [smem:[#allocation0]]
  $region42: #{tpu_custom_call.1} parent=0
    _
  %s7 = ssub.s32 1, %s5
  %s8 = scalar_select 0, %s7, %s5
  $region1: #{tpu_custom_call.1} parent=0
    #allocation2 [shape = 'u8[4096]{0}', space=vmem, size = 0x1000, scoped, tag = 'input window, operand 0, single buffered']
    #allocation3 [shape = 's32[1]{0}', space=sflag, size = 0x4, scoped, tag = 'scoped memory for tpu_custom_call.1']
    #allocation4 [shape = 's32[1]{0}', space=sflag, size = 0x4, scoped, tag = 'scoped memory for tpu_custom_call.1']
    #allocation5 [shape = 'u8[65536]{0}', space=vmem, size = 0x10000, scoped, tag = 'input window, operand 1, single buffered']
    #allocation6 [shape = 's32[1]{0}', space=sflag, size = 0x4, scoped, tag = 'scoped memory for tpu_custom_call.1']
    #allocation7 [shape = 'u8[65536]{0}', space=vmem, size = 0x10000, scoped, tag = 'input window, operand 2, single buffered']
    #allocation8 [shape = 'u8[4096]{0}', space=vmem, size = 0x1000, scoped, tag = 'input window, operand 3, single buffered']
    #allocation9 [shape = 's32[1]{0}', space=sflag, size = 0x4, scoped, tag = 'scoped memory for tpu_custom_call.1']
    #allocation10 [shape = 'u8[4096]{0}', space=vmem, size = 0x1000, scoped, tag = 'output window, operand 0, single buffered']
    %9 = vsyncpa [#allocation3], 0
    %10 = vsyncpa [#allocation6], 0
    %11 = vsyncpa [#allocation9], 0
    %12 = vsyncpa [#allocation4], 0
    // Predicated region
    $region2: #{tpu_custom_call.1} parent=1 // pred_check
      _
    $region3: #{tpu_custom_call.1} parent=1 // pred_check_branch
      %14 = sbr.rel (0) target = $region5
    $region4: #{tpu_custom_call.1} parent=1 // pred_region
      %s16 = ssub.s32 128, 128
      %17 = vsyncadd [#allocation3], %s16
      %s19 = sshll.u32 [#allocation2], 4
      %s20 = int_to_ptr.vmem [resolvable:$true] %s19
      %22 = dma.hbm_to_vmem [thread:$0]  %s0, 128, %s20, [#allocation3]
    $region5: #{tpu_custom_call.1} parent=1 // pred_fallthru
      _
    // Predicated region
    $region6: #{tpu_custom_call.1} parent=1 // pred_check
      _
    $region7: #{tpu_custom_call.1} parent=1 // pred_check_branch
      %24 = sbr.rel (0) target = $region9
    $region8: #{tpu_custom_call.1} parent=1 // pred_region
      %s26 = ssub.s32 2048, 2048
      %27 = vsyncadd [#allocation6], %s26
      %s28 = sshll.u32 [#allocation5], 4
      %s29 = int_to_ptr.vmem [resolvable:$true] %s28
      %34 = dma.hbm_to_vmem [thread:$0]  %s1, 2048, %s29, [#allocation6], 128, 128, 8
    $region9: #{tpu_custom_call.1} parent=1 // pred_fallthru
      _
    // Predicated region
    $region10: #{tpu_custom_call.1} parent=1 // pred_check
      _
    $region11: #{tpu_custom_call.1} parent=1 // pred_check_branch
      %36 = sbr.rel (0) target = $region13
    $region12: #{tpu_custom_call.1} parent=1 // pred_region
      %s38 = ssub.s32 2048, 2048
      %39 = vsyncadd [#allocation6], %s38
      %s40 = sshll.u32 [#allocation7], 4
      %s41 = int_to_ptr.vmem [resolvable:$true] %s40
      %46 = dma.hbm_to_vmem [thread:$0]  %s2, 2048, %s41, [#allocation6], 128, 128, 8
    $region13: #{tpu_custom_call.1} parent=1 // pred_fallthru
      _
    // Predicated region
    $region14: #{tpu_custom_call.1} parent=1 // pred_check
      _
    $region15: #{tpu_custom_call.1} parent=1 // pred_check_branch
      %48 = sbr.rel (0) target = $region17
    $region16: #{tpu_custom_call.1} parent=1 // pred_region
      %s50 = ssub.s32 128, 128
      %51 = vsyncadd [#allocation9], %s50
      %s53 = sshll.u32 [#allocation8], 4
      %s54 = int_to_ptr.vmem [resolvable:$true] %s53
      %56 = dma.hbm_to_vmem [thread:$0]  %s3, 128, %s54, [#allocation9]
    $region17: #{tpu_custom_call.1} parent=1 // pred_fallthru
      _
    // Predicated region
    $region18: #{tpu_custom_call.1} parent=1 // pred_check
      _
    $region19: #{tpu_custom_call.1} parent=1 // pred_check_branch
      %58 = sbr.rel (0) target = $region21
    $region20: #{tpu_custom_call.1} parent=1 // pred_region
      %59 = dma.done [#allocation3], 128
    $region21: #{tpu_custom_call.1} parent=1 // pred_fallthru
      _
    // Predicated region
    $region22: #{tpu_custom_call.1} parent=1 // pred_check
      _
    $region23: #{tpu_custom_call.1} parent=1 // pred_check_branch
      %61 = sbr.rel (0) target = $region25
    $region24: #{tpu_custom_call.1} parent=1 // pred_region
      %62 = dma.done [#allocation6], 2048
    $region25: #{tpu_custom_call.1} parent=1 // pred_fallthru
      _
    // Predicated region
    $region26: #{tpu_custom_call.1} parent=1 // pred_check
      _
    $region27: #{tpu_custom_call.1} parent=1 // pred_check_branch
      %64 = sbr.rel (0) target = $region29
    $region28: #{tpu_custom_call.1} parent=1 // pred_region
      %65 = dma.done [#allocation6], 2048
    $region29: #{tpu_custom_call.1} parent=1 // pred_fallthru
      _
    // Predicated region
    $region30: #{tpu_custom_call.1} parent=1 // pred_check
      _
    $region31: #{tpu_custom_call.1} parent=1 // pred_check_branch
      %67 = sbr.rel (0) target = $region33
    $region32: #{tpu_custom_call.1} parent=1 // pred_region
      %68 = dma.done [#allocation9], 128
    $region33: #{tpu_custom_call.1} parent=1 // pred_fallthru
      _
    %v69 = vld [vmem:[#allocation2] sm:$0xff]
    %v70 = vld [vmem:[#allocation8] sm:$0x1]
    %v71 = vld [vmem:[#allocation8 + $0x1] sm:$0x1]
    %v72 = vld [vmem:[#allocation8 + $0x2] sm:$0x1]
    %v73 = vld [vmem:[#allocation8 + $0x3] sm:$0x1]
    %v74 = vld [vmem:[#allocation5] sm:$0xff]
    %v75 = vld [vmem:[#allocation5 + $0x8] sm:$0xff]
    %v76 = vld [vmem:[#allocation5 + $0x10] sm:$0xff]
    %v77 = vld [vmem:[#allocation5 + $0x18] sm:$0xff]
    %v78 = vld [vmem:[#allocation5 + $0x20] sm:$0xff]
    %v79 = vld [vmem:[#allocation5 + $0x28] sm:$0xff]
    %v80 = vld [vmem:[#allocation5 + $0x30] sm:$0xff]
    %v81 = vld [vmem:[#allocation5 + $0x38] sm:$0xff]
    %v82 = vld [vmem:[#allocation5 + $0x40] sm:$0xff]
    %v83 = vld [vmem:[#allocation5 + $0x48] sm:$0xff]
    %v84 = vld [vmem:[#allocation5 + $0x50] sm:$0xff]
    %v85 = vld [vmem:[#allocation5 + $0x58] sm:$0xff]
    %v86 = vld [vmem:[#allocation5 + $0x60] sm:$0xff]
    %v87 = vld [vmem:[#allocation5 + $0x68] sm:$0xff]
    %v88 = vld [vmem:[#allocation5 + $0x70] sm:$0xff]
    %v89 = vld [vmem:[#allocation5 + $0x78] sm:$0xff]
    %v90 = vlaneseq
    %v91 = vshrl.u32 %v90, 7
    %v92 = vsub.s32 0, %v91
    %v93 = vrot.slane %v70, %v92
    %94 = vmatprep.subr.mxu0 0.0
    %95 = vmatpush1.msra.mxu0 %v89
    %96 = vmatprep.subr.mxu0 0.0
    %97 = vmatpush1.msra.mxu0 %v88
    %98 = vmatprep.subr.mxu0 0.0
    %99 = vmatpush1.msra.mxu0 %v87
    %100 = vmatprep.subr.mxu0 0.0
    %101 = vmatpush1.msra.mxu0 %v86
    %102 = vmatprep.subr.mxu0 0.0
    %103 = vmatpush1.msra.mxu0 %v85
    %104 = vmatprep.subr.mxu0 0.0
    %105 = vmatpush1.msra.mxu0 %v84
    %106 = vmatprep.subr.mxu0 0.0
    %107 = vmatpush1.msra.mxu0 %v83
    %108 = vmatprep.subr.mxu0 0.0
    %109 = vmatpush1.msra.mxu0 %v82
    %110 = vmatprep.subr.mxu0 0.0
    %111 = vmatpush1.msra.mxu0 %v81
    %112 = vmatprep.subr.mxu0 0.0
    %113 = vmatpush1.msra.mxu0 %v80
    %114 = vmatprep.subr.mxu0 0.0
    %115 = vmatpush1.msra.mxu0 %v79
    %116 = vmatprep.subr.mxu0 0.0
    %117 = vmatpush1.msra.mxu0 %v78
    %118 = vmatprep.subr.mxu0 0.0
    %119 = vmatpush1.msra.mxu0 %v77
    %120 = vmatprep.subr.mxu0 0.0
    %121 = vmatpush1.msra.mxu0 %v76
    %122 = vmatprep.subr.mxu0 0.0
    %123 = vmatpush1.msra.mxu0 %v75
    %124 = vmatprep.subr.mxu0 0.0
    %125 = vmatpush1.msra.mxu0 %v74
    %126 = vmatprep.subr.mxu0 0.0
    %127 = vmatpush2.msra.mxu0 0.0
    %128 = vmatprep.subr.mxu0 0.0
    %129 = vmatpush2.msra.mxu0 0.0
    %130 = vmatprep.subr.mxu0 0.0
    %131 = vmatpush2.msra.mxu0 0.0
    %132 = vmatprep.subr.mxu0 0.0
    %133 = vmatpush2.msra.mxu0 0.0
    %134 = vmatprep.subr.mxu0 0.0
    %135 = vmatpush2.msra.mxu0 0.0
    %136 = vmatprep.subr.mxu0 0.0
    %137 = vmatpush2.msra.mxu0 0.0
    %138 = vmatprep.subr.mxu0 0.0
    %139 = vmatpush2.msra.mxu0 0.0
    %140 = vmatprep.subr.mxu0 0.0
    %141 = vmatpush2.msra.mxu0 0.0
    %142 = vmatprep.subr.mxu0 0.0
    %143 = vmatpush2.msra.mxu0 0.0
    %144 = vmatprep.subr.mxu0 0.0
    %145 = vmatpush2.msra.mxu0 0.0
    %146 = vmatprep.subr.mxu0 0.0
    %147 = vmatpush2.msra.mxu0 0.0
    %148 = vmatprep.subr.mxu0 0.0
    %149 = vmatpush2.msra.mxu0 0.0
    %150 = vmatprep.subr.mxu0 0.0
    %151 = vmatpush2.msra.mxu0 0.0
    %152 = vmatprep.subr.mxu0 0.0
    %153 = vmatpush2.msra.mxu0 0.0
    %154 = vmatprep.subr.mxu0 0.0
    %155 = vmatpush2.msra.mxu0 0.0
    %156 = vmatprep.subr.mxu0 0.0
    %157 = vmatpush2.msra.mxu0 0.0
    %158 = vmatprep.mubr.f32.mxu0 0.0
    %159 = vmatmul.mubr.f32.gmra.mxu0 %v69
    %v160 = vpop.f32.mrf.mxu0
    %v161 = vadd.f32 %v93, %v160
    %v162 = vpop.f32.mrf.mxu0
    %163 = vdwg.mxu0
    %v164 = vmul.f32 %v161, 0.5
    %v165 = vmul.f32 %v161, 0.70710677
    %v166 = verf.f32.pop %v165
    %v167 = vadd.f32 %v166, 1.0
    %v168 = vmul.f32 %v164, %v167
    %v169 = vld [vmem:[#allocation7] sm:$0xff]
    %v170 = vld [vmem:[#allocation7 + $0x8] sm:$0xff]
    %v171 = vld [vmem:[#allocation7 + $0x10] sm:$0xff]
    %v172 = vld [vmem:[#allocation7 + $0x18] sm:$0xff]
    %v173 = vld [vmem:[#allocation7 + $0x20] sm:$0xff]
    %v174 = vld [vmem:[#allocation7 + $0x28] sm:$0xff]
    %v175 = vld [vmem:[#allocation7 + $0x30] sm:$0xff]
    %v176 = vld [vmem:[#allocation7 + $0x38] sm:$0xff]
    %v177 = vld [vmem:[#allocation7 + $0x40] sm:$0xff]
    %v178 = vld [vmem:[#allocation7 + $0x48] sm:$0xff]
    %v179 = vld [vmem:[#allocation7 + $0x50] sm:$0xff]
    %v180 = vld [vmem:[#allocation7 + $0x58] sm:$0xff]
    %v181 = vld [vmem:[#allocation7 + $0x60] sm:$0xff]
    %v182 = vld [vmem:[#allocation7 + $0x68] sm:$0xff]
    %v183 = vld [vmem:[#allocation7 + $0x70] sm:$0xff]
    %v184 = vld [vmem:[#allocation7 + $0x78] sm:$0xff]
    %v185 = vlaneseq
    %v186 = vshrl.u32 %v185, 7
    %v187 = vsub.s32 0, %v186
    %v188 = vrot.slane %v71, %v187
    %189 = vmatprep.subr.mxu0 0.0
    %190 = vmatpush1.msra.mxu0 %v184
    %191 = vmatprep.subr.mxu0 0.0
    %192 = vmatpush1.msra.mxu0 %v183
    %193 = vmatprep.subr.mxu0 0.0
    %194 = vmatpush1.msra.mxu0 %v182
    %195 = vmatprep.subr.mxu0 0.0
    %196 = vmatpush1.msra.mxu0 %v181
    %197 = vmatprep.subr.mxu0 0.0
    %198 = vmatpush1.msra.mxu0 %v180
    %199 = vmatprep.subr.mxu0 0.0
    %200 = vmatpush1.msra.mxu0 %v179
    %201 = vmatprep.subr.mxu0 0.0
    %202 = vmatpush1.msra.mxu0 %v178
    %203 = vmatprep.subr.mxu0 0.0
    %204 = vmatpush1.msra.mxu0 %v177
    %205 = vmatprep.subr.mxu0 0.0
    %206 = vmatpush1.msra.mxu0 %v176
    %207 = vmatprep.subr.mxu0 0.0
    %208 = vmatpush1.msra.mxu0 %v175
    %209 = vmatprep.subr.mxu0 0.0
    %210 = vmatpush1.msra.mxu0 %v174
    %211 = vmatprep.subr.mxu0 0.0
    %212 = vmatpush1.msra.mxu0 %v173
    %213 = vmatprep.subr.mxu0 0.0
    %214 = vmatpush1.msra.mxu0 %v172
    %215 = vmatprep.subr.mxu0 0.0
    %216 = vmatpush1.msra.mxu0 %v171
    %217 = vmatprep.subr.mxu0 0.0
    %218 = vmatpush1.msra.mxu0 %v170
    %219 = vmatprep.subr.mxu0 0.0
    %220 = vmatpush1.msra.mxu0 %v169
    %221 = vmatprep.subr.mxu0 0.0
    %222 = vmatpush2.msra.mxu0 0.0
    %223 = vmatprep.subr.mxu0 0.0
    %224 = vmatpush2.msra.mxu0 0.0
    %225 = vmatprep.subr.mxu0 0.0
    %226 = vmatpush2.msra.mxu0 0.0
    %227 = vmatprep.subr.mxu0 0.0
    %228 = vmatpush2.msra.mxu0 0.0
    %229 = vmatprep.subr.mxu0 0.0
    %230 = vmatpush2.msra.mxu0 0.0
    %231 = vmatprep.subr.mxu0 0.0
    %232 = vmatpush2.msra.mxu0 0.0
    %233 = vmatprep.subr.mxu0 0.0
    %234 = vmatpush2.msra.mxu0 0.0
    %235 = vmatprep.subr.mxu0 0.0
    %236 = vmatpush2.msra.mxu0 0.0
    %237 = vmatprep.subr.mxu0 0.0
    %238 = vmatpush2.msra.mxu0 0.0
    %239 = vmatprep.subr.mxu0 0.0
    %240 = vmatpush2.msra.mxu0 0.0
    %241 = vmatprep.subr.mxu0 0.0
    %242 = vmatpush2.msra.mxu0 0.0
    %243 = vmatprep.subr.mxu0 0.0
    %244 = vmatpush2.msra.mxu0 0.0
    %245 = vmatprep.subr.mxu0 0.0
    %246 = vmatpush2.msra.mxu0 0.0
    %247 = vmatprep.subr.mxu0 0.0
    %248 = vmatpush2.msra.mxu0 0.0
    %249 = vmatprep.subr.mxu0 0.0
    %250 = vmatpush2.msra.mxu0 0.0
    %251 = vmatprep.subr.mxu0 0.0
    %252 = vmatpush2.msra.mxu0 0.0
    %253 = vmatprep.mubr.f32.mxu0 0.0
    %254 = vmatmul.mubr.f32.gmra.mxu0 %v168
    %v255 = vpop.f32.mrf.mxu0
    %v256 = vadd.f32 %v188, %v255
    %v257 = vpop.f32.mrf.mxu0
    %258 = vdwg.mxu0
    %259 = vadd.xlane.f32.xlu0 %v256
    %v260 = vpop.xlane.xlu0 %259
    %v261 = vmul.f32 %v260, 0.03125
    %v262 = vmul.f32 %v256, %v256
    %263 = vadd.xlane.f32.xlu0 %v262
    %v264 = vpop.xlane.xlu0 %263
    %v265 = vmul.f32 %v264, 0.03125
    %v266 = vmul.f32 %v261, %v261
    %v267 = vsub.f32 %v265, %v266
    %v268 = vmax.f32 %v267, 0.0
    %v269 = vadd.f32 %v268, 1e-05
    %v270 = vrsqrt.pop %v269
    %v271 = vsub.f32 %v256, %v261
    %v272 = vmul.f32 %v271, %v270
    %v273 = vlaneseq
    %v274 = vshrl.u32 %v273, 7
    %v275 = vsub.s32 0, %v274
    %v276 = vrot.slane %v72, %v275
    %v277 = vmul.f32 %v272, %v276
    %v278 = vlaneseq
    %v279 = vshrl.u32 %v278, 7
    %v280 = vsub.s32 0, %v279
    %v281 = vrot.slane %v73, %v280
    %v282 = vadd.f32 %v277, %v281
    %283 = vst [vmem:[#allocation10] sm:$0xff] %v282
    // Predicated region
    $region34: #{tpu_custom_call.1} parent=1 // pred_check
      _
    $region35: #{tpu_custom_call.1} parent=1 // pred_check_branch
      %285 = sbr.rel (0) target = $region37
    $region36: #{tpu_custom_call.1} parent=1 // pred_region
      %s287 = ssub.s32 128, 128
      %288 = vsyncadd [#allocation4], %s287
      %s290 = sshll.u32 [#allocation10], 4
      %s291 = int_to_ptr.vmem [resolvable:$true] %s290
      %293 = dma.vmem_to_hbm [thread:$0]  %s291, 128, %s4, [#allocation4]
    $region37: #{tpu_custom_call.1} parent=1 // pred_fallthru
      _
    // Predicated region
    $region38: #{tpu_custom_call.1} parent=1 // pred_check
      _
    $region39: #{tpu_custom_call.1} parent=1 // pred_check_branch
      %295 = sbr.rel (0) target = $region41
    $region40: #{tpu_custom_call.1} parent=1 // pred_region
      %296 = dma.done [#allocation4], 128
    $region41: #{tpu_custom_call.1} parent=1 // pred_fallthru
      _
    %297 = vsyncpa [#allocation3], 1
    %298 = vsyncpa [#allocation6], 1
    %299 = vsyncpa [#allocation9], 1
    %300 = vsyncpa [#allocation4], 1

// kernel: tpu_custom_call.1
$region0: #{tpu_custom_call.1}
  #allocation0 [shape = 'u32[]', space=smem, size = 0x4, offset = 0x4, fixed_abs, tag = 'smem constant byte address 0x4 - core index']
  #allocation1 [shape = 'u32[144,128]{1,0:T(1,128)}', space=vmem, size = 0x12000, scoped, tag = 'internal scratch']
  %s0 = inlined_call_operand.hbm [shape: f32[8,128], index: 0, kind: input, shape index: {}]
  %s1 = inlined_call_operand.hbm [shape: f32[128,128], index: 1, kind: input, shape index: {}]
  %s2 = inlined_call_operand.hbm [shape: f32[128,128], index: 2, kind: input, shape index: {}]
  %s3 = inlined_call_operand.hbm [shape: f32[8,128], index: 3, kind: input, shape index: {}]
  %s4 = inlined_call_operand.hbm [shape: f32[8,128], index: 4, kind: output, shape index: {}]
  %s5 = sld [smem:[#allocation0]]
  $region42: #{tpu_custom_call.1} parent=0
    _
  %s7 = ssub.s32 1, %s5
  %s8 = scalar_select 0, %s7, %s5
  $region1: #{tpu_custom_call.1} parent=0
    #allocation2 [shape = 'u8[4096]{0}', space=vmem, size = 0x1000, scoped, tag = 'input window, operand 0, single buffered']
    #allocation3 [shape = 's32[1]{0}', space=sflag, size = 0x4, scoped, tag = 'scoped memory for tpu_custom_call.1']
    #allocation4 [shape = 's32[1]{0}', space=sflag, size = 0x4, scoped, tag = 'scoped memory for tpu_custom_call.1']
    #allocation5 [shape = 'u8[65536]{0}', space=vmem, size = 0x10000, scoped, tag = 'input window, operand 1, single buffered']
    #allocation6 [shape = 's32[1]{0}', space=sflag, size = 0x4, scoped, tag = 'scoped memory for tpu_custom_call.1']
    #allocation7 [shape = 'u8[65536]{0}', space=vmem, size = 0x10000, scoped, tag = 'input window, operand 2, single buffered']
    #allocation8 [shape = 'u8[4096]{0}', space=vmem, size = 0x1000, scoped, tag = 'input window, operand 3, single buffered']
    #allocation9 [shape = 's32[1]{0}', space=sflag, size = 0x4, scoped, tag = 'scoped memory for tpu_custom_call.1']
    #allocation10 [shape = 'u8[4096]{0}', space=vmem, size = 0x1000, scoped, tag = 'output window, operand 0, single buffered']
    %9 = vsyncpa [#allocation3], 0
    %10 = vsyncpa [#allocation6], 0
    %11 = vsyncpa [#allocation9], 0
    %12 = vsyncpa [#allocation4], 0
    // Predicated region
    $region2: #{tpu_custom_call.1} parent=1 // pred_check
      _
    $region3: #{tpu_custom_call.1} parent=1 // pred_check_branch
      %14 = sbr.rel (0) target = $region5
    $region4: #{tpu_custom_call.1} parent=1 // pred_region
      %s16 = ssub.s32 128, 128
      %17 = vsyncadd [#allocation3], %s16
      %s19 = sshll.u32 [#allocation2], 4
      %s20 = int_to_ptr.vmem [resolvable:$true] %s19
      %22 = dma.hbm_to_vmem [thread:$0]  %s0, 128, %s20, [#allocation3]
    $region5: #{tpu_custom_call.1} parent=1 // pred_fallthru
      _
    // Predicated region
    $region6: #{tpu_custom_call.1} parent=1 // pred_check
      _
    $region7: #{tpu_custom_call.1} parent=1 // pred_check_branch
      %24 = sbr.rel (0) target = $region9
    $region8: #{tpu_custom_call.1} parent=1 // pred_region
      %s26 = ssub.s32 2048, 2048
      %27 = vsyncadd [#allocation6], %s26
      %s28 = sshll.u32 [#allocation5], 4
      %s29 = int_to_ptr.vmem [resolvable:$true] %s28
      %34 = dma.hbm_to_vmem [thread:$0]  %s1, 2048, %s29, [#allocation6], 128, 128, 8
    $region9: #{tpu_custom_call.1} parent=1 // pred_fallthru
      _
    // Predicated region
    $region10: #{tpu_custom_call.1} parent=1 // pred_check
      _
    $region11: #{tpu_custom_call.1} parent=1 // pred_check_branch
      %36 = sbr.rel (0) target = $region13
    $region12: #{tpu_custom_call.1} parent=1 // pred_region
      %s38 = ssub.s32 2048, 2048
      %39 = vsyncadd [#allocation6], %s38
      %s40 = sshll.u32 [#allocation7], 4
      %s41 = int_to_ptr.vmem [resolvable:$true] %s40
      %46 = dma.hbm_to_vmem [thread:$0]  %s2, 2048, %s41, [#allocation6], 128, 128, 8
    $region13: #{tpu_custom_call.1} parent=1 // pred_fallthru
      _
    // Predicated region
    $region14: #{tpu_custom_call.1} parent=1 // pred_check
      _
    $region15: #{tpu_custom_call.1} parent=1 // pred_check_branch
      %48 = sbr.rel (0) target = $region17
    $region16: #{tpu_custom_call.1} parent=1 // pred_region
      %s50 = ssub.s32 128, 128
      %51 = vsyncadd [#allocation9], %s50
      %s53 = sshll.u32 [#allocation8], 4
      %s54 = int_to_ptr.vmem [resolvable:$true] %s53
      %56 = dma.hbm_to_vmem [thread:$0]  %s3, 128, %s54, [#allocation9]
    $region17: #{tpu_custom_call.1} parent=1 // pred_fallthru
      _
    // Predicated region
    $region18: #{tpu_custom_call.1} parent=1 // pred_check
      _
    $region19: #{tpu_custom_call.1} parent=1 // pred_check_branch
      %58 = sbr.rel (0) target = $region21
    $region20: #{tpu_custom_call.1} parent=1 // pred_region
      %59 = dma.done [#allocation3], 128
    $region21: #{tpu_custom_call.1} parent=1 // pred_fallthru
      _
    // Predicated region
    $region22: #{tpu_custom_call.1} parent=1 // pred_check
      _
    $region23: #{tpu_custom_call.1} parent=1 // pred_check_branch
      %61 = sbr.rel (0) target = $region25
    $region24: #{tpu_custom_call.1} parent=1 // pred_region
      %62 = dma.done [#allocation6], 2048
    $region25: #{tpu_custom_call.1} parent=1 // pred_fallthru
      _
    // Predicated region
    $region26: #{tpu_custom_call.1} parent=1 // pred_check
      _
    $region27: #{tpu_custom_call.1} parent=1 // pred_check_branch
      %64 = sbr.rel (0) target = $region29
    $region28: #{tpu_custom_call.1} parent=1 // pred_region
      %65 = dma.done [#allocation6], 2048
    $region29: #{tpu_custom_call.1} parent=1 // pred_fallthru
      _
    // Predicated region
    $region30: #{tpu_custom_call.1} parent=1 // pred_check
      _
    $region31: #{tpu_custom_call.1} parent=1 // pred_check_branch
      %67 = sbr.rel (0) target = $region33
    $region32: #{tpu_custom_call.1} parent=1 // pred_region
      %68 = dma.done [#allocation9], 128
    $region33: #{tpu_custom_call.1} parent=1 // pred_fallthru
      _
    %v69 = vld [vmem:[#allocation2] sm:$0xff]
    %v70 = vld [vmem:[#allocation8] sm:$0x1]
    %v71 = vld [vmem:[#allocation8 + $0x1] sm:$0x1]
    %v72 = vld [vmem:[#allocation8 + $0x2] sm:$0x1]
    %v73 = vld [vmem:[#allocation8 + $0x3] sm:$0x1]
    %v74 = vld [vmem:[#allocation5] sm:$0xff]
    %v75 = vld [vmem:[#allocation5 + $0x8] sm:$0xff]
    %v76 = vld [vmem:[#allocation5 + $0x10] sm:$0xff]
    %v77 = vld [vmem:[#allocation5 + $0x18] sm:$0xff]
    %v78 = vld [vmem:[#allocation5 + $0x20] sm:$0xff]
    %v79 = vld [vmem:[#allocation5 + $0x28] sm:$0xff]
    %v80 = vld [vmem:[#allocation5 + $0x30] sm:$0xff]
    %v81 = vld [vmem:[#allocation5 + $0x38] sm:$0xff]
    %v82 = vld [vmem:[#allocation5 + $0x40] sm:$0xff]
    %v83 = vld [vmem:[#allocation5 + $0x48] sm:$0xff]
    %v84 = vld [vmem:[#allocation5 + $0x50] sm:$0xff]
    %v85 = vld [vmem:[#allocation5 + $0x58] sm:$0xff]
    %v86 = vld [vmem:[#allocation5 + $0x60] sm:$0xff]
    %v87 = vld [vmem:[#allocation5 + $0x68] sm:$0xff]
    %v88 = vld [vmem:[#allocation5 + $0x70] sm:$0xff]
    %v89 = vld [vmem:[#allocation5 + $0x78] sm:$0xff]
    %v90 = vlaneseq
    %v91 = vshrl.u32 %v90, 7
    %v92 = vsub.s32 0, %v91
    %v93 = vrot.slane %v70, %v92
    %94 = vmatprep.subr.mxu0 0.0
    %95 = vmatpush1.msra.mxu0 %v89
    %96 = vmatprep.subr.mxu0 0.0
    %97 = vmatpush1.msra.mxu0 %v88
    %98 = vmatprep.subr.mxu0 0.0
    %99 = vmatpush1.msra.mxu0 %v87
    %100 = vmatprep.subr.mxu0 0.0
    %101 = vmatpush1.msra.mxu0 %v86
    %102 = vmatprep.subr.mxu0 0.0
    %103 = vmatpush1.msra.mxu0 %v85
    %104 = vmatprep.subr.mxu0 0.0
    %105 = vmatpush1.msra.mxu0 %v84
    %106 = vmatprep.subr.mxu0 0.0
    %107 = vmatpush1.msra.mxu0 %v83
    %108 = vmatprep.subr.mxu0 0.0
    %109 = vmatpush1.msra.mxu0 %v82
    %110 = vmatprep.subr.mxu0 0.0
    %111 = vmatpush1.msra.mxu0 %v81
    %112 = vmatprep.subr.mxu0 0.0
    %113 = vmatpush1.msra.mxu0 %v80
    %114 = vmatprep.subr.mxu0 0.0
    %115 = vmatpush1.msra.mxu0 %v79
    %116 = vmatprep.subr.mxu0 0.0
    %117 = vmatpush1.msra.mxu0 %v78
    %118 = vmatprep.subr.mxu0 0.0
    %119 = vmatpush1.msra.mxu0 %v77
    %120 = vmatprep.subr.mxu0 0.0
    %121 = vmatpush1.msra.mxu0 %v76
    %122 = vmatprep.subr.mxu0 0.0
    %123 = vmatpush1.msra.mxu0 %v75
    %124 = vmatprep.subr.mxu0 0.0
    %125 = vmatpush1.msra.mxu0 %v74
    %126 = vmatprep.subr.mxu0 0.0
    %127 = vmatpush2.msra.mxu0 0.0
    %128 = vmatprep.subr.mxu0 0.0
    %129 = vmatpush2.msra.mxu0 0.0
    %130 = vmatprep.subr.mxu0 0.0
    %131 = vmatpush2.msra.mxu0 0.0
    %132 = vmatprep.subr.mxu0 0.0
    %133 = vmatpush2.msra.mxu0 0.0
    %134 = vmatprep.subr.mxu0 0.0
    %135 = vmatpush2.msra.mxu0 0.0
    %136 = vmatprep.subr.mxu0 0.0
    %137 = vmatpush2.msra.mxu0 0.0
    %138 = vmatprep.subr.mxu0 0.0
    %139 = vmatpush2.msra.mxu0 0.0
    %140 = vmatprep.subr.mxu0 0.0
    %141 = vmatpush2.msra.mxu0 0.0
    %142 = vmatprep.subr.mxu0 0.0
    %143 = vmatpush2.msra.mxu0 0.0
    %144 = vmatprep.subr.mxu0 0.0
    %145 = vmatpush2.msra.mxu0 0.0
    %146 = vmatprep.subr.mxu0 0.0
    %147 = vmatpush2.msra.mxu0 0.0
    %148 = vmatprep.subr.mxu0 0.0
    %149 = vmatpush2.msra.mxu0 0.0
    %150 = vmatprep.subr.mxu0 0.0
    %151 = vmatpush2.msra.mxu0 0.0
    %152 = vmatprep.subr.mxu0 0.0
    %153 = vmatpush2.msra.mxu0 0.0
    %154 = vmatprep.subr.mxu0 0.0
    %155 = vmatpush2.msra.mxu0 0.0
    %156 = vmatprep.subr.mxu0 0.0
    %157 = vmatpush2.msra.mxu0 0.0
    %158 = vmatprep.mubr.f32.mxu0 0.0
    %159 = vmatmul.mubr.f32.gmra.mxu0 %v69
    %v160 = vpop.f32.mrf.mxu0
    %v161 = vadd.f32 %v93, %v160
    %v162 = vpop.f32.mrf.mxu0
    %163 = vdwg.mxu0
    %v164 = vmul.f32 %v161, 0.5
    %v165 = vmul.f32 %v161, 0.70710677
    %v166 = verf.f32.pop %v165
    %v167 = vadd.f32 %v166, 1.0
    %v168 = vmul.f32 %v164, %v167
    %v169 = vld [vmem:[#allocation7] sm:$0xff]
    %v170 = vld [vmem:[#allocation7 + $0x8] sm:$0xff]
    %v171 = vld [vmem:[#allocation7 + $0x10] sm:$0xff]
    %v172 = vld [vmem:[#allocation7 + $0x18] sm:$0xff]
    %v173 = vld [vmem:[#allocation7 + $0x20] sm:$0xff]
    %v174 = vld [vmem:[#allocation7 + $0x28] sm:$0xff]
    %v175 = vld [vmem:[#allocation7 + $0x30] sm:$0xff]
    %v176 = vld [vmem:[#allocation7 + $0x38] sm:$0xff]
    %v177 = vld [vmem:[#allocation7 + $0x40] sm:$0xff]
    %v178 = vld [vmem:[#allocation7 + $0x48] sm:$0xff]
    %v179 = vld [vmem:[#allocation7 + $0x50] sm:$0xff]
    %v180 = vld [vmem:[#allocation7 + $0x58] sm:$0xff]
    %v181 = vld [vmem:[#allocation7 + $0x60] sm:$0xff]
    %v182 = vld [vmem:[#allocation7 + $0x68] sm:$0xff]
    %v183 = vld [vmem:[#allocation7 + $0x70] sm:$0xff]
    %v184 = vld [vmem:[#allocation7 + $0x78] sm:$0xff]
    %v185 = vlaneseq
    %v186 = vshrl.u32 %v185, 7
    %v187 = vsub.s32 0, %v186
    %v188 = vrot.slane %v71, %v187
    %189 = vmatprep.subr.mxu0 0.0
    %190 = vmatpush1.msra.mxu0 %v184
    %191 = vmatprep.subr.mxu0 0.0
    %192 = vmatpush1.msra.mxu0 %v183
    %193 = vmatprep.subr.mxu0 0.0
    %194 = vmatpush1.msra.mxu0 %v182
    %195 = vmatprep.subr.mxu0 0.0
    %196 = vmatpush1.msra.mxu0 %v181
    %197 = vmatprep.subr.mxu0 0.0
    %198 = vmatpush1.msra.mxu0 %v180
    %199 = vmatprep.subr.mxu0 0.0
    %200 = vmatpush1.msra.mxu0 %v179
    %201 = vmatprep.subr.mxu0 0.0
    %202 = vmatpush1.msra.mxu0 %v178
    %203 = vmatprep.subr.mxu0 0.0
    %204 = vmatpush1.msra.mxu0 %v177
    %205 = vmatprep.subr.mxu0 0.0
    %206 = vmatpush1.msra.mxu0 %v176
    %207 = vmatprep.subr.mxu0 0.0
    %208 = vmatpush1.msra.mxu0 %v175
    %209 = vmatprep.subr.mxu0 0.0
    %210 = vmatpush1.msra.mxu0 %v174
    %211 = vmatprep.subr.mxu0 0.0
    %212 = vmatpush1.msra.mxu0 %v173
    %213 = vmatprep.subr.mxu0 0.0
    %214 = vmatpush1.msra.mxu0 %v172
    %215 = vmatprep.subr.mxu0 0.0
    %216 = vmatpush1.msra.mxu0 %v171
    %217 = vmatprep.subr.mxu0 0.0
    %218 = vmatpush1.msra.mxu0 %v170
    %219 = vmatprep.subr.mxu0 0.0
    %220 = vmatpush1.msra.mxu0 %v169
    %221 = vmatprep.subr.mxu0 0.0
    %222 = vmatpush2.msra.mxu0 0.0
    %223 = vmatprep.subr.mxu0 0.0
    %224 = vmatpush2.msra.mxu0 0.0
    %225 = vmatprep.subr.mxu0 0.0
    %226 = vmatpush2.msra.mxu0 0.0
    %227 = vmatprep.subr.mxu0 0.0
    %228 = vmatpush2.msra.mxu0 0.0
    %229 = vmatprep.subr.mxu0 0.0
    %230 = vmatpush2.msra.mxu0 0.0
    %231 = vmatprep.subr.mxu0 0.0
    %232 = vmatpush2.msra.mxu0 0.0
    %233 = vmatprep.subr.mxu0 0.0
    %234 = vmatpush2.msra.mxu0 0.0
    %235 = vmatprep.subr.mxu0 0.0
    %236 = vmatpush2.msra.mxu0 0.0
    %237 = vmatprep.subr.mxu0 0.0
    %238 = vmatpush2.msra.mxu0 0.0
    %239 = vmatprep.subr.mxu0 0.0
    %240 = vmatpush2.msra.mxu0 0.0
    %241 = vmatprep.subr.mxu0 0.0
    %242 = vmatpush2.msra.mxu0 0.0
    %243 = vmatprep.subr.mxu0 0.0
    %244 = vmatpush2.msra.mxu0 0.0
    %245 = vmatprep.subr.mxu0 0.0
    %246 = vmatpush2.msra.mxu0 0.0
    %247 = vmatprep.subr.mxu0 0.0
    %248 = vmatpush2.msra.mxu0 0.0
    %249 = vmatprep.subr.mxu0 0.0
    %250 = vmatpush2.msra.mxu0 0.0
    %251 = vmatprep.subr.mxu0 0.0
    %252 = vmatpush2.msra.mxu0 0.0
    %253 = vmatprep.mubr.f32.mxu0 0.0
    %254 = vmatmul.mubr.f32.gmra.mxu0 %v168
    %v255 = vpop.f32.mrf.mxu0
    %v256 = vadd.f32 %v188, %v255
    %v257 = vpop.f32.mrf.mxu0
    %258 = vdwg.mxu0
    %259 = vadd.xlane.f32.xlu0 %v256
    %v260 = vpop.xlane.xlu0 %259
    %v261 = vmul.f32 %v260, 0.03125
    %v262 = vmul.f32 %v256, %v256
    %263 = vadd.xlane.f32.xlu0 %v262
    %v264 = vpop.xlane.xlu0 %263
    %v265 = vmul.f32 %v264, 0.03125
    %v266 = vmul.f32 %v261, %v261
    %v267 = vsub.f32 %v265, %v266
    %v268 = vmax.f32 %v267, 0.0
    %v269 = vadd.f32 %v268, 1e-05
    %v270 = vrsqrt.pop %v269
    %v271 = vsub.f32 %v256, %v261
    %v272 = vmul.f32 %v271, %v270
    %v273 = vlaneseq
    %v274 = vshrl.u32 %v273, 7
    %v275 = vsub.s32 0, %v274
    %v276 = vrot.slane %v72, %v275
    %v277 = vmul.f32 %v272, %v276
    %v278 = vlaneseq
    %v279 = vshrl.u32 %v278, 7
    %v280 = vsub.s32 0, %v279
    %v281 = vrot.slane %v73, %v280
    %v282 = vadd.f32 %v277, %v281
    %283 = vst [vmem:[#allocation10] sm:$0xff] %v282
    // Predicated region
    $region34: #{tpu_custom_call.1} parent=1 // pred_check
      _
    $region35: #{tpu_custom_call.1} parent=1 // pred_check_branch
      %285 = sbr.rel (0) target = $region37
    $region36: #{tpu_custom_call.1} parent=1 // pred_region
      %s287 = ssub.s32 128, 128
      %288 = vsyncadd [#allocation4], %s287
      %s290 = sshll.u32 [#allocation10], 4
      %s291 = int_to_ptr.vmem [resolvable:$true] %s290
      %293 = dma.vmem_to_hbm [thread:$0]  %s291, 128, %s4, [#allocation4]
    $region37: #{tpu_custom_call.1} parent=1 // pred_fallthru
      _
    // Predicated region
    $region38: #{tpu_custom_call.1} parent=1 // pred_check
      _
    $region39: #{tpu_custom_call.1} parent=1 // pred_check_branch
      %295 = sbr.rel (0) target = $region41
    $region40: #{tpu_custom_call.1} parent=1 // pred_region
      %296 = dma.done [#allocation4], 128
    $region41: #{tpu_custom_call.1} parent=1 // pred_fallthru
      _
    %297 = vsyncpa [#allocation3], 1
    %298 = vsyncpa [#allocation6], 1
    %299 = vsyncpa [#allocation9], 1
    %300 = vsyncpa [#allocation4], 1

</llo_original>
